<compile_context>
chip_gen: v7x
topology: tpu7x:2x2x1
jax: 0.10.0
libtpu: 0.0.40
codegen_flags: <defaults>
</compile_context>

<pallas_src>
import functools

import jax
import jax.numpy as jnp
from jax.experimental import pallas as pl
from jax.experimental.pallas import tpu as pltpu


# ---------------------------------------------------------------------------
# Kernel
# ---------------------------------------------------------------------------
def _attention_kernel(x_ref, wqkv_ref, wo_ref, bout_ref, o_ref, slab_ref, *,
                      heads, dim_head, scale, bblk, seq, dim, compute_dtype):
    """One grid step == one block of `bblk` batch elements.

    x_ref    : (Bblk, N, D)          VMEM
    wqkv_ref : (D, 3*inner)          VMEM (full; columns = [q_heads|k_heads|v_heads])
    wo_ref   : (inner, D)            VMEM (full)
    bout_ref : (1, D)                VMEM (full)
    o_ref    : (Bblk, N, D)          VMEM
    slab_ref : (Bblk*N, inner)       VMEM scratch (concatenated head outputs)
    """
    m = bblk * seq
    inner = heads * dim_head

    # Fused (batch*seq, D) slab: projections see M rows instead of N per batch.
    x = x_ref[...].reshape(m, dim).astype(compute_dtype)               # (M, D)

    # One fused projection for q, k, v of ALL heads (single wide MXU matmul).
    qkv = jnp.dot(x, wqkv_ref[...], preferred_element_type=jnp.float32)  # (M, 3*inner)

    q_all = (qkv[:, 0 * inner:1 * inner] * scale).astype(compute_dtype)
    k_all = qkv[:, 1 * inner:2 * inner].astype(compute_dtype)
    v_all = qkv[:, 2 * inner:3 * inner].astype(compute_dtype)

    # TODO(synk): for large head counts, replace static unrolling with a
    # fori_loop / heads grid axis to bound vreg live ranges.
    for h in range(heads):
        lo, hi = h * dim_head, (h + 1) * dim_head
        # Attention is restricted to tokens of the same batch element.
        q3 = q_all[:, lo:hi].reshape(bblk, seq, dim_head)
        k3 = k_all[:, lo:hi].reshape(bblk, seq, dim_head)
        v3 = v_all[:, lo:hi].reshape(bblk, seq, dim_head)

        dots = jnp.einsum('bnd,bmd->bnm', q3, k3,
                          preferred_element_type=jnp.float32)          # (Bblk, N, N)
        dots = dots - jnp.max(dots, axis=-1, keepdims=True)            # f32 softmax
        p = jnp.exp(dots)
        rowsum = jnp.sum(p, axis=-1, keepdims=True)                    # (Bblk, N, 1)

        oh = jnp.einsum('bnm,bmd->bnd', p.astype(compute_dtype), v3,
                        preferred_element_type=jnp.float32)            # (Bblk, N, Dh)

        # Fold the softmax denominator into the (much smaller) head output.
        if compute_dtype == jnp.float32:
            inv = 1.0 / rowsum                        # exact: tight f32 validation
        else:
            inv = pl.reciprocal(rowsum, approx=True)  # EUP slot, ~free
        oh = oh * inv

        # Concatenated-head slab lives in VMEM scratch (no SSA accumulator).
        slab_ref[:, lo:hi] = oh.reshape(m, dim_head).astype(slab_ref.dtype)

    # Single K=inner output projection + bias for the whole slab.
    out = jnp.dot(slab_ref[...], wo_ref[...], preferred_element_type=jnp.float32)
    out = out + bout_ref[...].astype(jnp.float32)
    o_ref[...] = out.reshape(bblk, seq, dim).astype(o_ref.dtype)


# ---------------------------------------------------------------------------
# Wrapper
# ---------------------------------------------------------------------------
def attention_pallas(x, w_qkv, w_out, b_out, *, heads, dim_head,
                     batch_block=None, compute_dtype=jnp.bfloat16):
    """x: (B, N, D); w_qkv: (D, 3*heads*dim_head); w_out: (heads*dim_head, D);
    b_out: (1, D).  Returns (B, N, D) in x.dtype."""
    B, N, D = x.shape
    inner = heads * dim_head
    assert w_qkv.shape == (D, 3 * inner)
    assert w_out.shape == (inner, D)
    scale = dim_head ** (-0.5)

    # Fuse batch elements so each grid step's projections see ~128 rows, but
    # keep >= 2 parallel grid steps when possible (v7x megacore sharding).
    if batch_block is None:
        batch_block = min(B, max(1, 128 // max(N, 1)))
        if B >= 2 and B // batch_block < 2:
            batch_block = max(1, B // 2)
    while B % batch_block:           # must divide B
        batch_block -= 1
    grid = (B // batch_block,)

    wq = w_qkv.astype(compute_dtype) if w_qkv.dtype != compute_dtype else w_qkv
    wo = w_out.astype(compute_dtype) if w_out.dtype != compute_dtype else w_out

    kernel = functools.partial(
        _attention_kernel, heads=heads, dim_head=dim_head, scale=scale,
        bblk=batch_block, seq=N, dim=D, compute_dtype=compute_dtype)

    return pl.pallas_call(
        kernel,
        out_shape=jax.ShapeDtypeStruct((B, N, D), x.dtype),
        grid_spec=pltpu.PrefetchScalarGridSpec(
            num_scalar_prefetch=0,
            grid=grid,
            in_specs=[
                pl.BlockSpec((batch_block, N, D), lambda b: (b, 0, 0)),
                pl.BlockSpec((D, 3 * inner), lambda b: (0, 0)),
                pl.BlockSpec((inner, D), lambda b: (0, 0)),
                pl.BlockSpec((1, D), lambda b: (0, 0)),
            ],
            out_specs=pl.BlockSpec((batch_block, N, D), lambda b: (b, 0, 0)),
            scratch_shapes=[pltpu.VMEM((batch_block * N, inner), compute_dtype)],
        ),
        compiler_params=pltpu.CompilerParams(
            dimension_semantics=("parallel",),
            vmem_limit_bytes=64 * 1024 * 1024),
    )(x, wq, wo, b_out)


# ---------------------------------------------------------------------------
# Pure-JAX reference (mirrors the PyTorch forward exactly, f32)
# ---------------------------------------------------------------------------
def attention_ref(x, w_qkv, w_out, b_out, *, heads, dim_head):
    B, N, D = x.shape
    scale = dim_head ** (-0.5)
    qkv = x @ w_qkv
    q, k, v = jnp.split(qkv, 3, axis=-1)

    def split_heads(t):  # 'b n (h d) -> b h n d'
        return t.reshape(B, N, heads, dim_head).transpose(0, 2, 1, 3)

    q, k, v = map(split_heads, (q, k, v))
    dots = jnp.einsum('bhnd,bhmd->bhnm', q, k) * scale
    attn = jax.nn.softmax(dots, axis=-1)
    out = jnp.einsum('bhnm,bhmd->bhnd', attn, v)
    out = out.transpose(0, 2, 1, 3).reshape(B, N, heads * dim_head)
    return out @ w_out + b_out


# ---------------------------------------------------------------------------
# Main
# ---------------------------------------------------------------------------
if __name__ == "__main__":
    # Small shapes consistent with the module: dim=32, heads=4, dim_head=16
    # -> inner_dim=64, project_out=True (to_out Linear has a bias); dropout=0.0.
    B, N, DIM = 2, 8, 32
    HEADS, DIM_HEAD = 4, 16
    INNER = HEADS * DIM_HEAD

    key = jax.random.PRNGKey(0)
    kx, kq, ko, kb = jax.random.split(key, 4)

    x = jax.random.normal(kx, (B, N, DIM), dtype=jnp.float32)
    # to_qkv: nn.Linear(dim, inner*3, bias=False); stored as (dim, 3*inner) so the
    # forward is x @ w_qkv  (== x @ W.T in PyTorch terms).
    w_qkv = jax.random.normal(kq, (DIM, 3 * INNER), dtype=jnp.float32) * 0.05
    # to_out[0]: nn.Linear(inner, dim) with bias.
    w_out = jax.random.normal(ko, (INNER, DIM), dtype=jnp.float32) * 0.05
    b_out = jax.random.normal(kb, (1, DIM), dtype=jnp.float32) * 0.05

    ref = attention_ref(x, w_qkv, w_out, b_out, heads=HEADS, dim_head=DIM_HEAD)

    # f32-compute run: tight check of the restructured math (exact reciprocal).
    out_f32 = attention_pallas(x, w_qkv, w_out, b_out,
                               heads=HEADS, dim_head=DIM_HEAD,
                               compute_dtype=jnp.float32)
    out_f32 = jax.block_until_ready(out_f32)
    assert out_f32.shape == (B, N, DIM)
    assert jnp.allclose(out_f32, ref, atol=1e-4, rtol=1e-4), "f32 mismatch vs reference"

    # bf16 MXU-operand run (default fast path) -> relaxed tolerance vs f32 reference.
    out = attention_pallas(x, w_qkv, w_out, b_out,
                           heads=HEADS, dim_head=DIM_HEAD,
                           compute_dtype=jnp.bfloat16)
    out = jax.block_until_ready(out)
    assert out.shape == (B, N, DIM)
    assert jnp.allclose(out, ref, atol=3e-2, rtol=3e-2), "bf16 mismatch vs reference"

    print("KERNEL_OK")
</pallas_src>

<mosaic_0001>
module attributes {stable_mosaic.version = 11 : i64} {
  func.func @_attention_kernel(%arg0: i32, %arg1: memref<1x8x32xf32, #tpu.memory_space<vmem>>, %arg2: memref<32x192xf32, #tpu.memory_space<vmem>>, %arg3: memref<64x32xf32, #tpu.memory_space<vmem>>, %arg4: memref<1x32xf32, #tpu.memory_space<vmem>>, %arg5: memref<1x8x32xf32, #tpu.memory_space<vmem>>, %arg6: memref<8x64xf32, #tpu.memory_space<vmem>>) attributes {dimension_semantics = [#tpu.dimension_semantics<parallel>], iteration_bounds = array<i64: 2>, scalar_prefetch = 0 : i64, scratch_operands = 1 : i64, tpu.core_type = #tpu.core_type<tc>, window_params = [{transform_indices = @transform_0, window_bounds = array<i64: 1, 8, 32>}, {pipeline_mode = #tpu.pipeline_mode<synchronous>, transform_indices = @transform_1, window_bounds = array<i64: 32, 192>}, {pipeline_mode = #tpu.pipeline_mode<synchronous>, transform_indices = @transform_2, window_bounds = array<i64: 64, 32>}, {pipeline_mode = #tpu.pipeline_mode<synchronous>, transform_indices = @transform_3, window_bounds = array<i64: 1, 32>}, {transform_indices = @transform_4, window_bounds = array<i64: 1, 8, 32>}]} {
    %c0 = arith.constant 0 : index
    %c0_0 = arith.constant 0 : index
    %c0_1 = arith.constant 0 : index
    %0 = vector.load %arg1[%c0, %c0_0, %c0_1] : memref<1x8x32xf32, #tpu.memory_space<vmem>>, vector<1x8x32xf32>
    %1 = vector.shape_cast %0 : vector<1x8x32xf32> to vector<8x32xf32>
    %c0_2 = arith.constant 0 : index
    %c0_3 = arith.constant 0 : index
    %2 = vector.load %arg2[%c0_2, %c0_3] : memref<32x192xf32, #tpu.memory_space<vmem>>, vector<32x192xf32>
    %cst = arith.constant dense<0.000000e+00> : vector<8x192xf32>
    %3 = tpu.matmul %1, %2, %cst {dimension_numbers = #tpu.dot_dimension_numbers<[1], [0], [0], [1], [0, 0, 1, 1], [], []>} : vector<8x32xf32>, vector<32x192xf32>, vector<8x192xf32> -> vector<8x192xf32>
    %4 = vector.extract_strided_slice %3 {offsets = [0, 0], sizes = [8, 64], strides = [1, 1]} : vector<8x192xf32> to vector<8x64xf32>
    %cst_4 = arith.constant 2.500000e-01 : f32
    %5 = vector.broadcast %cst_4 : f32 to vector<8x64xf32>
    %6 = arith.mulf %4, %5 : vector<8x64xf32>
    %7 = vector.extract_strided_slice %3 {offsets = [0, 64], sizes = [8, 64], strides = [1, 1]} : vector<8x192xf32> to vector<8x64xf32>
    %8 = vector.extract_strided_slice %3 {offsets = [0, 128], sizes = [8, 64], strides = [1, 1]} : vector<8x192xf32> to vector<8x64xf32>
    %9 = vector.extract_strided_slice %6 {offsets = [0, 0], sizes = [8, 16], strides = [1, 1]} : vector<8x64xf32> to vector<8x16xf32>
    %10 = vector.shape_cast %9 : vector<8x16xf32> to vector<1x8x16xf32>
    %11 = vector.extract_strided_slice %7 {offsets = [0, 0], sizes = [8, 16], strides = [1, 1]} : vector<8x64xf32> to vector<8x16xf32>
    %12 = vector.shape_cast %11 : vector<8x16xf32> to vector<1x8x16xf32>
    %13 = vector.extract_strided_slice %8 {offsets = [0, 0], sizes = [8, 16], strides = [1, 1]} : vector<8x64xf32> to vector<8x16xf32>
    %14 = vector.shape_cast %13 : vector<8x16xf32> to vector<1x8x16xf32>
    "tpu.trace_start"() <{level = 10 : i32, message = "bnd,bmd->bnm"}> : () -> ()
    %cst_5 = arith.constant dense<0.000000e+00> : vector<1x8x8xf32>
    %15 = tpu.matmul %10, %12, %cst_5 {dimension_numbers = #tpu.dot_dimension_numbers<[2], [2], [1], [1], [0, 0, 0, 1, 1, 1], [0], [0]>} : vector<1x8x16xf32>, vector<1x8x16xf32>, vector<1x8x8xf32> -> vector<1x8x8xf32>
    "tpu.trace_stop"() : () -> ()
    %cst_6 = arith.constant dense<0xFF800000> : vector<1x8xf32>
    %16 = vector.multi_reduction <maximumf>, %15, %cst_6 [2] : vector<1x8x8xf32> to vector<1x8xf32>
    %17 = vector.shape_cast %16 : vector<1x8xf32> to vector<1x8x1xf32>
    %18 = vector.broadcast %17 : vector<1x8x1xf32> to vector<1x8x8xf32>
    %19 = arith.subf %15, %18 : vector<1x8x8xf32>
    %20 = math.exp %19 : vector<1x8x8xf32>
    %cst_7 = arith.constant dense<0.000000e+00> : vector<1x8xf32>
    %21 = vector.multi_reduction <add>, %20, %cst_7 [2] : vector<1x8x8xf32> to vector<1x8xf32>
    %22 = vector.shape_cast %21 : vector<1x8xf32> to vector<1x8x1xf32>
    "tpu.trace_start"() <{level = 10 : i32, message = "bnm,bmd->bnd"}> : () -> ()
    %cst_8 = arith.constant dense<0.000000e+00> : vector<1x8x16xf32>
    %23 = tpu.matmul %20, %14, %cst_8 {dimension_numbers = #tpu.dot_dimension_numbers<[2], [1], [1], [2], [0, 0, 0, 1, 1, 2], [0], [0]>} : vector<1x8x8xf32>, vector<1x8x16xf32>, vector<1x8x16xf32> -> vector<1x8x16xf32>
    "tpu.trace_stop"() : () -> ()
    %cst_9 = arith.constant 1.000000e+00 : f32
    %24 = vector.broadcast %cst_9 : f32 to vector<1x8x1xf32>
    %25 = arith.divf %24, %22 : vector<1x8x1xf32>
    %26 = vector.broadcast %25 : vector<1x8x1xf32> to vector<1x8x16xf32>
    %27 = arith.mulf %23, %26 : vector<1x8x16xf32>
    %28 = vector.shape_cast %27 : vector<1x8x16xf32> to vector<8x16xf32>
    %c0_10 = arith.constant 0 : index
    %c0_11 = arith.constant 0 : index
    %29 = vector.load %arg6[%c0_10, %c0_11] : memref<8x64xf32, #tpu.memory_space<vmem>>, vector<8x16xf32>
    tpu.vector_store %arg6[%c0_10, %c0_11], %28 {strides = array<i32>} : memref<8x64xf32, #tpu.memory_space<vmem>>, vector<8x16xf32>,
    %30 = vector.extract_strided_slice %6 {offsets = [0, 16], sizes = [8, 16], strides = [1, 1]} : vector<8x64xf32> to vector<8x16xf32>
    %31 = vector.shape_cast %30 : vector<8x16xf32> to vector<1x8x16xf32>
    %32 = vector.extract_strided_slice %7 {offsets = [0, 16], sizes = [8, 16], strides = [1, 1]} : vector<8x64xf32> to vector<8x16xf32>
    %33 = vector.shape_cast %32 : vector<8x16xf32> to vector<1x8x16xf32>
    %34 = vector.extract_strided_slice %8 {offsets = [0, 16], sizes = [8, 16], strides = [1, 1]} : vector<8x64xf32> to vector<8x16xf32>
    %35 = vector.shape_cast %34 : vector<8x16xf32> to vector<1x8x16xf32>
    "tpu.trace_start"() <{level = 10 : i32, message = "bnd,bmd->bnm"}> : () -> ()
    %cst_12 = arith.constant dense<0.000000e+00> : vector<1x8x8xf32>
    %36 = tpu.matmul %31, %33, %cst_12 {dimension_numbers = #tpu.dot_dimension_numbers<[2], [2], [1], [1], [0, 0, 0, 1, 1, 1], [0], [0]>} : vector<1x8x16xf32>, vector<1x8x16xf32>, vector<1x8x8xf32> -> vector<1x8x8xf32>
    "tpu.trace_stop"() : () -> ()
    %cst_13 = arith.constant dense<0xFF800000> : vector<1x8xf32>
    %37 = vector.multi_reduction <maximumf>, %36, %cst_13 [2] : vector<1x8x8xf32> to vector<1x8xf32>
    %38 = vector.shape_cast %37 : vector<1x8xf32> to vector<1x8x1xf32>
    %39 = vector.broadcast %38 : vector<1x8x1xf32> to vector<1x8x8xf32>
    %40 = arith.subf %36, %39 : vector<1x8x8xf32>
    %41 = math.exp %40 : vector<1x8x8xf32>
    %cst_14 = arith.constant dense<0.000000e+00> : vector<1x8xf32>
    %42 = vector.multi_reduction <add>, %41, %cst_14 [2] : vector<1x8x8xf32> to vector<1x8xf32>
    %43 = vector.shape_cast %42 : vector<1x8xf32> to vector<1x8x1xf32>
    "tpu.trace_start"() <{level = 10 : i32, message = "bnm,bmd->bnd"}> : () -> ()
    %cst_15 = arith.constant dense<0.000000e+00> : vector<1x8x16xf32>
    %44 = tpu.matmul %41, %35, %cst_15 {dimension_numbers = #tpu.dot_dimension_numbers<[2], [1], [1], [2], [0, 0, 0, 1, 1, 2], [0], [0]>} : vector<1x8x8xf32>, vector<1x8x16xf32>, vector<1x8x16xf32> -> vector<1x8x16xf32>
    "tpu.trace_stop"() : () -> ()
    %cst_16 = arith.constant 1.000000e+00 : f32
    %45 = vector.broadcast %cst_16 : f32 to vector<1x8x1xf32>
    %46 = arith.divf %45, %43 : vector<1x8x1xf32>
    %47 = vector.broadcast %46 : vector<1x8x1xf32> to vector<1x8x16xf32>
    %48 = arith.mulf %44, %47 : vector<1x8x16xf32>
    %49 = vector.shape_cast %48 : vector<1x8x16xf32> to vector<8x16xf32>
    %c0_17 = arith.constant 0 : index
    %c16 = arith.constant 16 : index
    %50 = vector.load %arg6[%c0_17, %c16] : memref<8x64xf32, #tpu.memory_space<vmem>>, vector<8x16xf32>
    tpu.vector_store %arg6[%c0_17, %c16], %49 {strides = array<i32>} : memref<8x64xf32, #tpu.memory_space<vmem>>, vector<8x16xf32>,
    %51 = vector.extract_strided_slice %6 {offsets = [0, 32], sizes = [8, 16], strides = [1, 1]} : vector<8x64xf32> to vector<8x16xf32>
    %52 = vector.shape_cast %51 : vector<8x16xf32> to vector<1x8x16xf32>
    %53 = vector.extract_strided_slice %7 {offsets = [0, 32], sizes = [8, 16], strides = [1, 1]} : vector<8x64xf32> to vector<8x16xf32>
    %54 = vector.shape_cast %53 : vector<8x16xf32> to vector<1x8x16xf32>
    %55 = vector.extract_strided_slice %8 {offsets = [0, 32], sizes = [8, 16], strides = [1, 1]} : vector<8x64xf32> to vector<8x16xf32>
    %56 = vector.shape_cast %55 : vector<8x16xf32> to vector<1x8x16xf32>
    "tpu.trace_start"() <{level = 10 : i32, message = "bnd,bmd->bnm"}> : () -> ()
    %cst_18 = arith.constant dense<0.000000e+00> : vector<1x8x8xf32>
    %57 = tpu.matmul %52, %54, %cst_18 {dimension_numbers = #tpu.dot_dimension_numbers<[2], [2], [1], [1], [0, 0, 0, 1, 1, 1], [0], [0]>} : vector<1x8x16xf32>, vector<1x8x16xf32>, vector<1x8x8xf32> -> vector<1x8x8xf32>
    "tpu.trace_stop"() : () -> ()
    %cst_19 = arith.constant dense<0xFF800000> : vector<1x8xf32>
    %58 = vector.multi_reduction <maximumf>, %57, %cst_19 [2] : vector<1x8x8xf32> to vector<1x8xf32>
    %59 = vector.shape_cast %58 : vector<1x8xf32> to vector<1x8x1xf32>
    %60 = vector.broadcast %59 : vector<1x8x1xf32> to vector<1x8x8xf32>
    %61 = arith.subf %57, %60 : vector<1x8x8xf32>
    %62 = math.exp %61 : vector<1x8x8xf32>
    %cst_20 = arith.constant dense<0.000000e+00> : vector<1x8xf32>
    %63 = vector.multi_reduction <add>, %62, %cst_20 [2] : vector<1x8x8xf32> to vector<1x8xf32>
    %64 = vector.shape_cast %63 : vector<1x8xf32> to vector<1x8x1xf32>
    "tpu.trace_start"() <{level = 10 : i32, message = "bnm,bmd->bnd"}> : () -> ()
    %cst_21 = arith.constant dense<0.000000e+00> : vector<1x8x16xf32>
    %65 = tpu.matmul %62, %56, %cst_21 {dimension_numbers = #tpu.dot_dimension_numbers<[2], [1], [1], [2], [0, 0, 0, 1, 1, 2], [0], [0]>} : vector<1x8x8xf32>, vector<1x8x16xf32>, vector<1x8x16xf32> -> vector<1x8x16xf32>
    "tpu.trace_stop"() : () -> ()
    %cst_22 = arith.constant 1.000000e+00 : f32
    %66 = vector.broadcast %cst_22 : f32 to vector<1x8x1xf32>
    %67 = arith.divf %66, %64 : vector<1x8x1xf32>
    %68 = vector.broadcast %67 : vector<1x8x1xf32> to vector<1x8x16xf32>
    %69 = arith.mulf %65, %68 : vector<1x8x16xf32>
    %70 = vector.shape_cast %69 : vector<1x8x16xf32> to vector<8x16xf32>
    %c0_23 = arith.constant 0 : index
    %c32 = arith.constant 32 : index
    %71 = vector.load %arg6[%c0_23, %c32] : memref<8x64xf32, #tpu.memory_space<vmem>>, vector<8x16xf32>
    tpu.vector_store %arg6[%c0_23, %c32], %70 {strides = array<i32>} : memref<8x64xf32, #tpu.memory_space<vmem>>, vector<8x16xf32>,
    %72 = vector.extract_strided_slice %6 {offsets = [0, 48], sizes = [8, 16], strides = [1, 1]} : vector<8x64xf32> to vector<8x16xf32>
    %73 = vector.shape_cast %72 : vector<8x16xf32> to vector<1x8x16xf32>
    %74 = vector.extract_strided_slice %7 {offsets = [0, 48], sizes = [8, 16], strides = [1, 1]} : vector<8x64xf32> to vector<8x16xf32>
    %75 = vector.shape_cast %74 : vector<8x16xf32> to vector<1x8x16xf32>
    %76 = vector.extract_strided_slice %8 {offsets = [0, 48], sizes = [8, 16], strides = [1, 1]} : vector<8x64xf32> to vector<8x16xf32>
    %77 = vector.shape_cast %76 : vector<8x16xf32> to vector<1x8x16xf32>
    "tpu.trace_start"() <{level = 10 : i32, message = "bnd,bmd->bnm"}> : () -> ()
    %cst_24 = arith.constant dense<0.000000e+00> : vector<1x8x8xf32>
    %78 = tpu.matmul %73, %75, %cst_24 {dimension_numbers = #tpu.dot_dimension_numbers<[2], [2], [1], [1], [0, 0, 0, 1, 1, 1], [0], [0]>} : vector<1x8x16xf32>, vector<1x8x16xf32>, vector<1x8x8xf32> -> vector<1x8x8xf32>
    "tpu.trace_stop"() : () -> ()
    %cst_25 = arith.constant dense<0xFF800000> : vector<1x8xf32>
    %79 = vector.multi_reduction <maximumf>, %78, %cst_25 [2] : vector<1x8x8xf32> to vector<1x8xf32>
    %80 = vector.shape_cast %79 : vector<1x8xf32> to vector<1x8x1xf32>
    %81 = vector.broadcast %80 : vector<1x8x1xf32> to vector<1x8x8xf32>
    %82 = arith.subf %78, %81 : vector<1x8x8xf32>
    %83 = math.exp %82 : vector<1x8x8xf32>
    %cst_26 = arith.constant dense<0.000000e+00> : vector<1x8xf32>
    %84 = vector.multi_reduction <add>, %83, %cst_26 [2] : vector<1x8x8xf32> to vector<1x8xf32>
    %85 = vector.shape_cast %84 : vector<1x8xf32> to vector<1x8x1xf32>
    "tpu.trace_start"() <{level = 10 : i32, message = "bnm,bmd->bnd"}> : () -> ()
    %cst_27 = arith.constant dense<0.000000e+00> : vector<1x8x16xf32>
    %86 = tpu.matmul %83, %77, %cst_27 {dimension_numbers = #tpu.dot_dimension_numbers<[2], [1], [1], [2], [0, 0, 0, 1, 1, 2], [0], [0]>} : vector<1x8x8xf32>, vector<1x8x16xf32>, vector<1x8x16xf32> -> vector<1x8x16xf32>
    "tpu.trace_stop"() : () -> ()
    %cst_28 = arith.constant 1.000000e+00 : f32
    %87 = vector.broadcast %cst_28 : f32 to vector<1x8x1xf32>
    %88 = arith.divf %87, %85 : vector<1x8x1xf32>
    %89 = vector.broadcast %88 : vector<1x8x1xf32> to vector<1x8x16xf32>
    %90 = arith.mulf %86, %89 : vector<1x8x16xf32>
    %91 = vector.shape_cast %90 : vector<1x8x16xf32> to vector<8x16xf32>
    %c0_29 = arith.constant 0 : index
    %c48 = arith.constant 48 : index
    %92 = vector.load %arg6[%c0_29, %c48] : memref<8x64xf32, #tpu.memory_space<vmem>>, vector<8x16xf32>
    tpu.vector_store %arg6[%c0_29, %c48], %91 {strides = array<i32>} : memref<8x64xf32, #tpu.memory_space<vmem>>, vector<8x16xf32>,
    %c0_30 = arith.constant 0 : index
    %c0_31 = arith.constant 0 : index
    %93 = vector.load %arg6[%c0_30, %c0_31] : memref<8x64xf32, #tpu.memory_space<vmem>>, vector<8x64xf32>
    %c0_32 = arith.constant 0 : index
    %c0_33 = arith.constant 0 : index
    %94 = vector.load %arg3[%c0_32, %c0_33] : memref<64x32xf32, #tpu.memory_space<vmem>>, vector<64x32xf32>
    %cst_34 = arith.constant dense<0.000000e+00> : vector<8x32xf32>
    %95 = tpu.matmul %93, %94, %cst_34 {dimension_numbers = #tpu.dot_dimension_numbers<[1], [0], [0], [1], [0, 0, 1, 1], [], []>} : vector<8x64xf32>, vector<64x32xf32>, vector<8x32xf32> -> vector<8x32xf32>
    %c0_35 = arith.constant 0 : index
    %c0_36 = arith.constant 0 : index
    %96 = vector.load %arg4[%c0_35, %c0_36] : memref<1x32xf32, #tpu.memory_space<vmem>>, vector<1x32xf32>
    %97 = vector.broadcast %96 : vector<1x32xf32> to vector<8x32xf32>
    %98 = arith.addf %95, %97 : vector<8x32xf32>
    %99 = vector.shape_cast %98 : vector<8x32xf32> to vector<1x8x32xf32>
    %c0_37 = arith.constant 0 : index
    %c0_38 = arith.constant 0 : index
    %c0_39 = arith.constant 0 : index
    %100 = vector.load %arg5[%c0_37, %c0_38, %c0_39] : memref<1x8x32xf32, #tpu.memory_space<vmem>>, vector<1x8x32xf32>
    tpu.vector_store %arg5[%c0_37, %c0_38, %c0_39], %99 {strides = array<i32>} : memref<1x8x32xf32, #tpu.memory_space<vmem>>, vector<1x8x32xf32>,
    return
  }
  func.func @transform_0(%arg0: i32) -> (i32, i32, i32) {
    %c0_i32 = arith.constant 0 : i32
    %c0_i32_0 = arith.constant 0 : i32
    %c0_i32_1 = arith.constant 0 : i32
    return %arg0, %c0_i32, %c0_i32_0 : i32, i32, i32
  }
  func.func @transform_1(%arg0: i32) -> (i32, i32) {
    %c0_i32 = arith.constant 0 : i32
    %c0_i32_0 = arith.constant 0 : i32
    %c0_i32_1 = arith.constant 0 : i32
    return %c0_i32, %c0_i32_0 : i32, i32
  }
  func.func @transform_2(%arg0: i32) -> (i32, i32) {
    %c0_i32 = arith.constant 0 : i32
    %c0_i32_0 = arith.constant 0 : i32
    %c0_i32_1 = arith.constant 0 : i32
    return %c0_i32, %c0_i32_0 : i32, i32
  }
  func.func @transform_3(%arg0: i32) -> (i32, i32) {
    %c0_i32 = arith.constant 0 : i32
    %c0_i32_0 = arith.constant 0 : i32
    %c0_i32_1 = arith.constant 0 : i32
    return %c0_i32, %c0_i32_0 : i32, i32
  }
  func.func @transform_4(%arg0: i32) -> (i32, i32, i32) {
    %c0_i32 = arith.constant 0 : i32
    %c0_i32_0 = arith.constant 0 : i32
    %c0_i32_1 = arith.constant 0 : i32
    return %arg0, %c0_i32, %c0_i32_0 : i32, i32, i32
  }
}

</mosaic_0001>

<llo_original>
// kernel: tpu_custom_call.1
$region0: #{tpu_custom_call.1}
  #allocation0 [shape = 'u32[]', space=smem, size = 0x4, offset = 0x4, fixed_abs, tag = 'smem constant byte address 0x4 - core index']
  #allocation1 [shape = 'u32[144,128]{1,0:T(1,128)}', space=vmem, size = 0x12000, scoped, tag = 'internal scratch']
  #allocation2 [shape = 'f32[8,64]{1,0:T(8,128)}', space=vmem, size = 0x1000, scoped, tag = 'scratch operand']
  %s0 = inlined_call_operand.hbm [shape: f32[2,8,32], index: 0, kind: input, shape index: {}]
  %s1 = inlined_call_operand.hbm [shape: f32[32,192], index: 1, kind: input, shape index: {}]
  %s2 = inlined_call_operand.hbm [shape: f32[64,32], index: 2, kind: input, shape index: {}]
  %s3 = inlined_call_operand.hbm [shape: f32[1,32], index: 3, kind: input, shape index: {}]
  %s4 = inlined_call_operand.hbm [shape: f32[2,8,32], index: 4, kind: output, shape index: {}]
  %s5 = sld [smem:[#allocation0]]
  $region65: #{tpu_custom_call.1} parent=0
    _
  %s7 = ssub.s32 1, %s5
  %s8 = scalar_select 0, %s7, %s5
  $region1: #{tpu_custom_call.1} parent=0
    #allocation3 [shape = 'u8[8192]{0}', space=vmem, size = 0x2000, scoped, tag = 'input window, operand 0']
    #allocation4 [shape = 's32[2]{0}', space=sflag, size = 0x8, scoped, tag = 'scoped memory for tpu_custom_call.1']
    #allocation5 [shape = 's32[2]{0}', space=sflag, size = 0x8, scoped, tag = 'scoped memory for tpu_custom_call.1']
    #allocation6 [shape = 'u8[32768]{0}', space=vmem, size = 0x8000, scoped, tag = 'input window, operand 1, single buffered']
    #allocation7 [shape = 's32[1]{0}', space=sflag, size = 0x4, scoped, tag = 'scoped memory for tpu_custom_call.1']
    #allocation8 [shape = 'u8[32768]{0}', space=vmem, size = 0x8000, scoped, tag = 'input window, operand 2, single buffered']
    #allocation9 [shape = 'u8[512]{0}', space=vmem, size = 0x400, scoped, tag = 'input window, operand 3, single buffered']
    #allocation10 [shape = 's32[1]{0}', space=sflag, size = 0x4, scoped, tag = 'scoped memory for tpu_custom_call.1']
    #allocation11 [shape = 'u8[8192]{0}', space=vmem, size = 0x2000, scoped, tag = 'output window, operand 0']
    %9 = vsyncpa [#allocation4], 0
    %s10 = scalar_lea.sflag [#allocation4], 1
    %11 = vsyncpa %s10, 0
    %12 = vsyncpa [#allocation7], 0
    %13 = vsyncpa [#allocation10], 0
    %14 = vsyncpa [#allocation5], 0
    %s15 = scalar_lea.sflag [#allocation5], 1
    %16 = vsyncpa %s15, 0
    loop: start=0, step=1, limit=4
    $region2: #{tpu_custom_call.1} parent=1 // loop_pre_header
      _
    $region3: #{tpu_custom_call.1} parent=1 // loop_header
      %s18 = sphi 0, %s22
      %p19 = scmp.ge.s32.totalorder %s18, 4
      %s28 = sphi 0, %s30
      %s31 = sphi 0, %s28
      %s32 = sphi 0, %s31
      %s48 = sphi 0, %s32
      %s52 = sphi 0, %s52
      %s54 = sphi 0, %s52
      %s55 = sphi 0, %s54
      %s69 = sphi 0, %s55
      %s73 = sphi 0, %s73
      %s75 = sphi 0, %s73
      %s76 = sphi 0, %s75
      %s90 = sphi 0, %s76
      %s94 = sphi 0, %s94
      %s96 = sphi 0, %s94
      %s97 = sphi 0, %s96
      %s111 = sphi 0, %s97
      %s117 = sphi 0, %s119
      %s120 = sphi 0, %s117
      %s121 = sphi 0, %s120
      %s137 = sphi 0, %s121
    $region4: #{tpu_custom_call.1} parent=1 // loop_header_branch
      %21 = sbr.rel (%p19) target = $region8
    $region5: #{tpu_custom_call.1} parent=1 // loop_body
      %s23 = ssub.s32 %s18, 1
      %s24 = ssub.s32 %s18, 2
      %s25 = sadd.s32 %s18, 1
      %s26 = ssub.s32 %s18, %s25
      %p27 = scmp.eq.s32.totalorder %s26, 0
      %s29 = sadd.s32 %s28, 1
      %s30 = scalar_select %p27, %s28, %s29
      %p33 = pneg %p27
      %p34 = scmp.eq.s32.totalorder %s18, 1
      %p35 = por %p33, %p34
      %p36 = scmp.ne.s32.totalorder %s28, %s31
      %p37 = scmp.eq.s32.totalorder %s18, 0
      %p38 = por %p36, %p37
      %p39 = scmp.ne.s32.totalorder %s28, %s31
      %p40 = scmp.eq.s32.totalorder %s23, 1
      %p41 = por %p39, %p40
      %p42 = scmp.ne.s32.totalorder %s31, %s32
      %p43 = scmp.eq.s32.totalorder %s23, 0
      %p44 = por %p42, %p43
      %p45 = scmp.ne.s32.totalorder %s31, %s32
      %p46 = scmp.eq.s32.totalorder %s24, 1
      %p47 = por %p45, %p46
      %p49 = scmp.ne.s32.totalorder %s32, %s48
      %p50 = scmp.eq.s32.totalorder %s24, 0
      %p51 = por %p49, %p50
      %s53 = sadd.s32 %s52, 1
      %p56 = scmp.eq.s32.totalorder %s18, 1
      %p57 = scmp.ne.s32.totalorder %s52, %s54
      %p58 = scmp.eq.s32.totalorder %s18, 0
      %p59 = por %p57, %p58
      %p60 = scmp.ne.s32.totalorder %s52, %s54
      %p61 = scmp.eq.s32.totalorder %s23, 1
      %p62 = por %p60, %p61
      %p63 = scmp.ne.s32.totalorder %s54, %s55
      %p64 = scmp.eq.s32.totalorder %s23, 0
      %p65 = por %p63, %p64
      %p66 = scmp.ne.s32.totalorder %s54, %s55
      %p67 = scmp.eq.s32.totalorder %s24, 1
      %p68 = por %p66, %p67
      %p70 = scmp.ne.s32.totalorder %s55, %s69
      %p71 = scmp.eq.s32.totalorder %s24, 0
      %p72 = por %p70, %p71
      %s74 = sadd.s32 %s73, 1
      %p77 = scmp.eq.s32.totalorder %s18, 1
      %p78 = scmp.ne.s32.totalorder %s73, %s75
      %p79 = scmp.eq.s32.totalorder %s18, 0
      %p80 = por %p78, %p79
      %p81 = scmp.ne.s32.totalorder %s73, %s75
      %p82 = scmp.eq.s32.totalorder %s23, 1
      %p83 = por %p81, %p82
      %p84 = scmp.ne.s32.totalorder %s75, %s76
      %p85 = scmp.eq.s32.totalorder %s23, 0
      %p86 = por %p84, %p85
      %p87 = scmp.ne.s32.totalorder %s75, %s76
      %p88 = scmp.eq.s32.totalorder %s24, 1
      %p89 = por %p87, %p88
      %p91 = scmp.ne.s32.totalorder %s76, %s90
      %p92 = scmp.eq.s32.totalorder %s24, 0
      %p93 = por %p91, %p92
      %s95 = sadd.s32 %s94, 1
      %p98 = scmp.eq.s32.totalorder %s18, 1
      %p99 = scmp.ne.s32.totalorder %s94, %s96
      %p100 = scmp.eq.s32.totalorder %s18, 0
      %p101 = por %p99, %p100
      %p102 = scmp.ne.s32.totalorder %s94, %s96
      %p103 = scmp.eq.s32.totalorder %s23, 1
      %p104 = por %p102, %p103
      %p105 = scmp.ne.s32.totalorder %s96, %s97
      %p106 = scmp.eq.s32.totalorder %s23, 0
      %p107 = por %p105, %p106
      %p108 = scmp.ne.s32.totalorder %s96, %s97
      %p109 = scmp.eq.s32.totalorder %s24, 1
      %p110 = por %p108, %p109
      %p112 = scmp.ne.s32.totalorder %s97, %s111
      %p113 = scmp.eq.s32.totalorder %s24, 0
      %p114 = por %p112, %p113
      %s115 = ssub.s32 %s18, %s25
      %p116 = scmp.eq.s32.totalorder %s115, 0
      %s118 = sadd.s32 %s117, 1
      %s119 = scalar_select %p116, %s117, %s118
      %p122 = pneg %p116
      %p123 = scmp.eq.s32.totalorder %s18, 1
      %p124 = por %p122, %p123
      %p125 = scmp.ne.s32.totalorder %s117, %s120
      %p126 = scmp.eq.s32.totalorder %s18, 0
      %p127 = por %p125, %p126
      %p128 = scmp.ne.s32.totalorder %s117, %s120
      %p129 = scmp.eq.s32.totalorder %s23, 1
      %p130 = por %p128, %p129
      %p131 = scmp.ne.s32.totalorder %s120, %s121
      %p132 = scmp.eq.s32.totalorder %s23, 0
      %p133 = por %p131, %p132
      %p134 = scmp.ne.s32.totalorder %s120, %s121
      %p135 = scmp.eq.s32.totalorder %s24, 1
      %p136 = por %p134, %p135
      %p138 = scmp.ne.s32.totalorder %s121, %s137
      %p139 = scmp.eq.s32.totalorder %s24, 0
      %p140 = por %p138, %p139
      %p141 = scmp.le.s32.totalorder 1, %s18
      %p142 = scmp.lt.s32.totalorder %s18, 3
      %p143 = pnand %p141, %p142
      %p144 = pneg %p143
      // Predicated region
      $region9: #{tpu_custom_call.1} parent=5 // pred_check
        _
      $region10: #{tpu_custom_call.1} parent=5 // pred_check_branch
        %146 = sbr.rel (%p143) target = $region12
      $region11: #{tpu_custom_call.1} parent=5 // pred_region
        %s147 = ssub.s32 %s18, 1
        // Predicated region
        $region13: #{tpu_custom_call.1} parent=11 // pred_check
          %p148 = pneg %p65
        $region14: #{tpu_custom_call.1} parent=11 // pred_check_branch
          %150 = sbr.rel (%p148) target = $region16
        $region15: #{tpu_custom_call.1} parent=11 // pred_region
          %s152 = ssub.s32 1024, 1024
          %153 = vsyncadd [#allocation7], %s152
          %s154 = sshll.u32 [#allocation6], 4
          %s155 = int_to_ptr.vmem [resolvable:$true] %s154
          %160 = dma.hbm_to_vmem [thread:$0]  %s1, 1024, %s155, [#allocation7], 256, 256, 16
        $region16: #{tpu_custom_call.1} parent=11 // pred_fallthru
          _
        // Predicated region
        $region17: #{tpu_custom_call.1} parent=11 // pred_check
          %p161 = pneg %p86
        $region18: #{tpu_custom_call.1} parent=11 // pred_check_branch
          %163 = sbr.rel (%p161) target = $region20
        $region19: #{tpu_custom_call.1} parent=11 // pred_region
          %s165 = ssub.s32 1024, 1024
          %166 = vsyncadd [#allocation7], %s165
          %s167 = sshll.u32 [#allocation8], 4
          %s168 = int_to_ptr.vmem [resolvable:$true] %s167
          %173 = dma.hbm_to_vmem [thread:$0]  %s2, 1024, %s168, [#allocation7], 128, 128, 8
        $region20: #{tpu_custom_call.1} parent=11 // pred_fallthru
          _
        // Predicated region
        $region21: #{tpu_custom_call.1} parent=11 // pred_check
          %p174 = pneg %p107
        $region22: #{tpu_custom_call.1} parent=11 // pred_check_branch
          %176 = sbr.rel (%p174) target = $region24
        $region23: #{tpu_custom_call.1} parent=11 // pred_region
          %s178 = ssub.s32 16, 16
          %179 = vsyncadd [#allocation10], %s178
          %s181 = sshll.u32 [#allocation9], 4
          %s182 = int_to_ptr.vmem [resolvable:$true] %s181
          %184 = dma.hbm_to_vmem [thread:$0]  %s3, 16, %s182, [#allocation10]
        $region24: #{tpu_custom_call.1} parent=11 // pred_fallthru
          _
      $region12: #{tpu_custom_call.1} parent=5 // pred_fallthru
        _
      %p185 = scmp.lt.s32.totalorder %s18, 2
      // Predicated region
      $region25: #{tpu_custom_call.1} parent=5 // pred_check
        %p186 = pneg %p185
      $region26: #{tpu_custom_call.1} parent=5 // pred_check_branch
        %188 = sbr.rel (%p186) target = $region28
      $region27: #{tpu_custom_call.1} parent=5 // pred_region
        // Predicated region
        $region29: #{tpu_custom_call.1} parent=27 // pred_check
          %p189 = pneg %p38
        $region30: #{tpu_custom_call.1} parent=27 // pred_check_branch
          %191 = sbr.rel (%p189) target = $region32
        $region31: #{tpu_custom_call.1} parent=27 // pred_region
          %s192 = sand.u32 %s28, 1
          %s193 = scalar_lea.sflag [#allocation4], %s192
          %s194 = sand.u32 %s28, 1
          %s195 = smul.addr %s194, 8
          %s196 = scalar_lea.vmem [#allocation3], %s195
          %s198 = ssub.s32 128, 128
          %199 = vsyncadd %s193, %s198
          %s200 = smul.addr %s18, 128
          %s201 = scalar_lea.hbm %s0, %s200
          %s203 = sshll.u32 %s196, 4
          %s204 = int_to_ptr.vmem [resolvable:$true] %s203
          %206 = dma.hbm_to_vmem [thread:$0]  %s201, 128, %s204, %s193
        $region32: #{tpu_custom_call.1} parent=27 // pred_fallthru
          _
      $region28: #{tpu_custom_call.1} parent=5 // pred_fallthru
        _
      %p207 = scmp.le.s32.totalorder 1, %s18
      %p208 = scmp.lt.s32.totalorder %s18, 3
      %p209 = pnand %p207, %p208
      %p210 = pneg %p209
      // Predicated region
      $region33: #{tpu_custom_call.1} parent=5 // pred_check
        _
      $region34: #{tpu_custom_call.1} parent=5 // pred_check_branch
        %212 = sbr.rel (%p209) target = $region36
      $region35: #{tpu_custom_call.1} parent=5 // pred_region
        %s213 = ssub.s32 %s18, 1
        %s214 = sand.u32 %s31, 1
        %s215 = scalar_lea.sflag [#allocation4], %s214
        %s216 = sand.u32 %s31, 1
        %s217 = smul.addr %s216, 8
        %s218 = scalar_lea.vmem [#allocation3], %s217
        // Predicated region
        $region37: #{tpu_custom_call.1} parent=35 // pred_check
          %p219 = pneg %p44
        $region38: #{tpu_custom_call.1} parent=35 // pred_check_branch
          %221 = sbr.rel (%p219) target = $region40
        $region39: #{tpu_custom_call.1} parent=35 // pred_region
          %222 = dma.done %s215, 128
        $region40: #{tpu_custom_call.1} parent=35 // pred_fallthru
          _
        // Predicated region
        $region41: #{tpu_custom_call.1} parent=35 // pred_check
          %p223 = pneg %p65
        $region42: #{tpu_custom_call.1} parent=35 // pred_check_branch
          %225 = sbr.rel (%p223) target = $region44
        $region43: #{tpu_custom_call.1} parent=35 // pred_region
          %226 = dma.done [#allocation7], 1024
        $region44: #{tpu_custom_call.1} parent=35 // pred_fallthru
          _
        // Predicated region
        $region45: #{tpu_custom_call.1} parent=35 // pred_check
          %p227 = pneg %p86
        $region46: #{tpu_custom_call.1} parent=35 // pred_check_branch
          %229 = sbr.rel (%p227) target = $region48
        $region47: #{tpu_custom_call.1} parent=35 // pred_region
          %230 = dma.done [#allocation7], 1024
        $region48: #{tpu_custom_call.1} parent=35 // pred_fallthru
          _
        // Predicated region
        $region49: #{tpu_custom_call.1} parent=35 // pred_check
          %p231 = pneg %p107
        $region50: #{tpu_custom_call.1} parent=35 // pred_check_branch
          %233 = sbr.rel (%p231) target = $region52
        $region51: #{tpu_custom_call.1} parent=35 // pred_region
          %234 = dma.done [#allocation10], 16
        $region52: #{tpu_custom_call.1} parent=35 // pred_fallthru
          _
        %s235 = sand.u32 %s31, 1
        %s236 = scalar_lea.sflag [#allocation4], %s235
        %s237 = sand.u32 %s31, 1
        %s238 = smul.addr %s237, 8
        %s239 = scalar_lea.vmem [#allocation3], %s238
        %p240 = pneg %p44
        %p241 = pneg %p41
        %p242 = pneg %p65
        %p243 = pneg %p62
        %p244 = pneg %p86
        %p245 = pneg %p83
        %p246 = pneg %p107
        %p247 = pneg %p104
        %p248 = pneg %p133
        %p249 = pneg %p130
        %s250 = sand.u32 %s120, 1
        %s251 = scalar_lea.sflag [#allocation5], %s250
        %s252 = sand.u32 %s120, 1
        %s253 = smul.addr %s252, 8
        %s254 = scalar_lea.vmem [#allocation11], %s253
        %v255 = vld [vmem:[%s218] sm:$0xff]
        %v256 = vld [vmem:[#allocation6] sm:$0xff]
        %v257 = vld [vmem:[#allocation6 + $0x8] sm:$0xff]
        %v258 = vld [vmem:[#allocation6 + $0x10] sm:$0xff]
        %v259 = vld [vmem:[#allocation6 + $0x18] sm:$0xff]
        %v260 = vld [vmem:[#allocation6 + $0x20] sm:$0xff]
        %v261 = vld [vmem:[#allocation6 + $0x28] sm:$0xff]
        %v262 = vld [vmem:[#allocation6 + $0x30] sm:$0xff]
        %v263 = vld [vmem:[#allocation6 + $0x38] sm:$0xff]
        %vm264 = vcmask 261120
        %v266 = vsel %vm264, %v255, 0
        %268 = vmatprep.subr.mxu0 %v257
        %269 = vmatpush1.msra.mxu0 %v256
        %270 = vmatprep.subr.mxu0 %v259
        %271 = vmatpush1.msra.mxu0 %v258
        %272 = vmatprep.subr.mxu0 %v261
        %273 = vmatpush1.msra.mxu0 %v260
        %274 = vmatprep.subr.mxu0 %v263
        %275 = vmatpush1.msra.mxu0 %v262
        %276 = vmatprep.subr.mxu0 0.0
        %277 = vmatpush1.msra.mxu0 0.0
        %278 = vmatprep.subr.mxu0 0.0
        %279 = vmatpush1.msra.mxu0 0.0
        %280 = vmatprep.subr.mxu0 0.0
        %281 = vmatpush1.msra.mxu0 0.0
        %282 = vmatprep.subr.mxu0 0.0
        %283 = vmatpush1.msra.mxu0 0.0
        %284 = vmatprep.subr.mxu0 0.0
        %285 = vmatpush1.msra.mxu0 0.0
        %286 = vmatprep.subr.mxu0 0.0
        %287 = vmatpush1.msra.mxu0 0.0
        %288 = vmatprep.subr.mxu0 0.0
        %289 = vmatpush1.msra.mxu0 0.0
        %290 = vmatprep.subr.mxu0 0.0
        %291 = vmatpush1.msra.mxu0 0.0
        %292 = vmatprep.subr.mxu0 0.0
        %293 = vmatpush1.msra.mxu0 0.0
        %294 = vmatprep.subr.mxu0 0.0
        %295 = vmatpush1.msra.mxu0 0.0
        %296 = vmatprep.subr.mxu0 0.0
        %297 = vmatpush1.msra.mxu0 0.0
        %298 = vmatprep.subr.mxu0 0.0
        %299 = vmatpush1.msra.mxu0 0.0
        %300 = vmatprep.subr.mxu0 0.0
        %301 = vmatpush1.msra.mxu0 0.0
        %302 = vmatprep.subr.mxu0 0.0
        %303 = vmatpush1.msra.mxu0 0.0
        %304 = vmatprep.subr.mxu0 0.0
        %305 = vmatpush1.msra.mxu0 0.0
        %306 = vmatprep.subr.mxu0 0.0
        %307 = vmatpush1.msra.mxu0 0.0
        %308 = vmatprep.subr.mxu0 0.0
        %309 = vmatpush1.msra.mxu0 0.0
        %310 = vmatprep.subr.mxu0 0.0
        %311 = vmatpush1.msra.mxu0 0.0
        %312 = vmatprep.subr.mxu0 0.0
        %313 = vmatpush1.msra.mxu0 0.0
        %314 = vmatprep.subr.mxu0 0.0
        %315 = vmatpush1.msra.mxu0 0.0
        %316 = vmatprep.subr.mxu0 0.0
        %317 = vmatpush1.msra.mxu0 0.0
        %318 = vmatprep.subr.mxu0 0.0
        %319 = vmatpush1.msra.mxu0 0.0
        %320 = vmatprep.subr.mxu0 0.0
        %321 = vmatpush1.msra.mxu0 0.0
        %322 = vmatprep.subr.mxu0 0.0
        %323 = vmatpush1.msra.mxu0 0.0
        %324 = vmatprep.subr.mxu0 0.0
        %325 = vmatpush1.msra.mxu0 0.0
        %326 = vmatprep.subr.mxu0 0.0
        %327 = vmatpush1.msra.mxu0 0.0
        %328 = vmatprep.subr.mxu0 0.0
        %329 = vmatpush1.msra.mxu0 0.0
        %330 = vmatprep.subr.mxu0 0.0
        %331 = vmatpush1.msra.mxu0 0.0
        %332 = vmatprep.mubr.f32.mxu0 0.0
        %333 = vmatmul.mubr.f32.gmra.mrb[0].mxu0 %v266
        %v334 = vpop.f32.mrb[0].mxu0
        %v335 = vadd.f32 0.0, %v334
        %v336 = vpop.f32.mrb[0].mxu0
        %v337 = vadd.f32 0.0, %v336
        %338 = vdwg.mxu0
        %v339 = vmul.f32 %v335, 0.25
        %341 = vrot.lane.b32.xlu0 %v335, 64
        %v342 = vpop.permute.xlu0 %341
        %vm343 = vcmask 130048
        %v345 = vsel %vm343, %v339, 0
        %v347 = vsel %vm343, %v342, 0
        %349 = vmatprep.subr.mxu0 0.0
        %350 = vmatpush1.xpose.msra.mxu0 %v347
        %351 = vmatprep.subr.mxu0 0.0
        %352 = vmatpush1.xpose.msra.mxu0 0.0
        %353 = vmatprep.subr.mxu0 0.0
        %354 = vmatpush1.xpose.msra.mxu0 0.0
        %355 = vmatprep.subr.mxu0 0.0
        %356 = vmatpush1.xpose.msra.mxu0 0.0
        %357 = vmatprep.subr.mxu0 0.0
        %358 = vmatpush1.xpose.msra.mxu0 0.0
        %359 = vmatprep.subr.mxu0 0.0
        %360 = vmatpush1.xpose.msra.mxu0 0.0
        %361 = vmatprep.subr.mxu0 0.0
        %362 = vmatpush1.xpose.msra.mxu0 0.0
        %363 = vmatprep.subr.mxu0 0.0
        %364 = vmatpush1.xpose.msra.mxu0 0.0
        %365 = vmatprep.subr.mxu0 0.0
        %366 = vmatpush1.xpose.msra.mxu0 0.0
        %367 = vmatprep.subr.mxu0 0.0
        %368 = vmatpush1.xpose.msra.mxu0 0.0
        %369 = vmatprep.subr.mxu0 0.0
        %370 = vmatpush1.xpose.msra.mxu0 0.0
        %371 = vmatprep.subr.mxu0 0.0
        %372 = vmatpush1.xpose.msra.mxu0 0.0
        %373 = vmatprep.subr.mxu0 0.0
        %374 = vmatpush1.xpose.msra.mxu0 0.0
        %375 = vmatprep.subr.mxu0 0.0
        %376 = vmatpush1.xpose.msra.mxu0 0.0
        %377 = vmatprep.subr.mxu0 0.0
        %378 = vmatpush1.xpose.msra.mxu0 0.0
        %379 = vmatprep.subr.mxu0 0.0
        %380 = vmatpush1.xpose.msra.mxu0 0.0
        %381 = vmatprep.subr.mxu0 0.0
        %382 = vmatpush1.xpose.msra.mxu0 0.0
        %383 = vmatprep.subr.mxu0 0.0
        %384 = vmatpush1.xpose.msra.mxu0 0.0
        %385 = vmatprep.subr.mxu0 0.0
        %386 = vmatpush1.xpose.msra.mxu0 0.0
        %387 = vmatprep.subr.mxu0 0.0
        %388 = vmatpush1.xpose.msra.mxu0 0.0
        %389 = vmatprep.subr.mxu0 0.0
        %390 = vmatpush1.xpose.msra.mxu0 0.0
        %391 = vmatprep.subr.mxu0 0.0
        %392 = vmatpush1.xpose.msra.mxu0 0.0
        %393 = vmatprep.subr.mxu0 0.0
        %394 = vmatpush1.xpose.msra.mxu0 0.0
        %395 = vmatprep.subr.mxu0 0.0
        %396 = vmatpush1.xpose.msra.mxu0 0.0
        %397 = vmatprep.subr.mxu0 0.0
        %398 = vmatpush1.xpose.msra.mxu0 0.0
        %399 = vmatprep.subr.mxu0 0.0
        %400 = vmatpush1.xpose.msra.mxu0 0.0
        %401 = vmatprep.subr.mxu0 0.0
        %402 = vmatpush1.xpose.msra.mxu0 0.0
        %403 = vmatprep.subr.mxu0 0.0
        %404 = vmatpush1.xpose.msra.mxu0 0.0
        %405 = vmatprep.subr.mxu0 0.0
        %406 = vmatpush1.xpose.msra.mxu0 0.0
        %407 = vmatprep.subr.mxu0 0.0
        %408 = vmatpush1.xpose.msra.mxu0 0.0
        %409 = vmatprep.subr.mxu0 0.0
        %410 = vmatpush1.xpose.msra.mxu0 0.0
        %411 = vmatprep.subr.mxu0 0.0
        %412 = vmatpush1.xpose.msra.mxu0 0.0
        %413 = vmatprep.mubr.f32.mxu0 0.0
        %414 = vmatmul.mubr.f32.gmra.mrb[0].mxu0 %v345
        %v415 = vpop.f32.mrb[0].mxu0
        %v416 = vadd.f32 0.0, %v415
        %v417 = vpop.f32.mrb[0].mxu0
        %418 = vdwg.mxu0
        %vm419 = vcmask 64512
        %v420 = vsel %vm419, %v416, -inf
        %421 = vmax.xlane.f32.xlu0 %v420
        %v422 = vpop.xlane.xlu0 %421
        %v423 = vsub.f32 %v416, %v422
        %v424 = vmul.f32 %v423, 1.442695
        %v425 = vpow.pop %v424
        %v426 = vsel %vm419, %v425, 0.0
        %427 = vadd.xlane.f32.xlu0 %v426
        %v428 = vpop.xlane.xlu0 %427
        %v430 = vsel %vm419, %v425, 0
        %432 = vmatprep.subr.mxu0 0.0
        %433 = vmatpush1.msra.mxu0 %v337
        %434 = vmatprep.subr.mxu0 0.0
        %435 = vmatpush1.msra.mxu0 0.0
        %436 = vmatprep.subr.mxu0 0.0
        %437 = vmatpush1.msra.mxu0 0.0
        %438 = vmatprep.subr.mxu0 0.0
        %439 = vmatpush1.msra.mxu0 0.0
        %440 = vmatprep.subr.mxu0 0.0
        %441 = vmatpush1.msra.mxu0 0.0
        %442 = vmatprep.subr.mxu0 0.0
        %443 = vmatpush1.msra.mxu0 0.0
        %444 = vmatprep.subr.mxu0 0.0
        %445 = vmatpush1.msra.mxu0 0.0
        %446 = vmatprep.subr.mxu0 0.0
        %447 = vmatpush1.msra.mxu0 0.0
        %448 = vmatprep.subr.mxu0 0.0
        %449 = vmatpush1.msra.mxu0 0.0
        %450 = vmatprep.subr.mxu0 0.0
        %451 = vmatpush1.msra.mxu0 0.0
        %452 = vmatprep.subr.mxu0 0.0
        %453 = vmatpush1.msra.mxu0 0.0
        %454 = vmatprep.subr.mxu0 0.0
        %455 = vmatpush1.msra.mxu0 0.0
        %456 = vmatprep.subr.mxu0 0.0
        %457 = vmatpush1.msra.mxu0 0.0
        %458 = vmatprep.subr.mxu0 0.0
        %459 = vmatpush1.msra.mxu0 0.0
        %460 = vmatprep.subr.mxu0 0.0
        %461 = vmatpush1.msra.mxu0 0.0
        %462 = vmatprep.subr.mxu0 0.0
        %463 = vmatpush1.msra.mxu0 0.0
        %464 = vmatprep.subr.mxu0 0.0
        %465 = vmatpush1.msra.mxu0 0.0
        %466 = vmatprep.subr.mxu0 0.0
        %467 = vmatpush1.msra.mxu0 0.0
        %468 = vmatprep.subr.mxu0 0.0
        %469 = vmatpush1.msra.mxu0 0.0
        %470 = vmatprep.subr.mxu0 0.0
        %471 = vmatpush1.msra.mxu0 0.0
        %472 = vmatprep.subr.mxu0 0.0
        %473 = vmatpush1.msra.mxu0 0.0
        %474 = vmatprep.subr.mxu0 0.0
        %475 = vmatpush1.msra.mxu0 0.0
        %476 = vmatprep.subr.mxu0 0.0
        %477 = vmatpush1.msra.mxu0 0.0
        %478 = vmatprep.subr.mxu0 0.0
        %479 = vmatpush1.msra.mxu0 0.0
        %480 = vmatprep.subr.mxu0 0.0
        %481 = vmatpush1.msra.mxu0 0.0
        %482 = vmatprep.subr.mxu0 0.0
        %483 = vmatpush1.msra.mxu0 0.0
        %484 = vmatprep.subr.mxu0 0.0
        %485 = vmatpush1.msra.mxu0 0.0
        %486 = vmatprep.subr.mxu0 0.0
        %487 = vmatpush1.msra.mxu0 0.0
        %488 = vmatprep.subr.mxu0 0.0
        %489 = vmatpush1.msra.mxu0 0.0
        %490 = vmatprep.subr.mxu0 0.0
        %491 = vmatpush1.msra.mxu0 0.0
        %492 = vmatprep.subr.mxu0 0.0
        %493 = vmatpush1.msra.mxu0 0.0
        %494 = vmatprep.subr.mxu0 0.0
        %495 = vmatpush1.msra.mxu0 0.0
        %496 = vmatprep.mubr.f32.mxu0 0.0
        %497 = vmatmul.mubr.f32.gmra.mrb[0].mxu0 %v430
        %v498 = vpop.f32.mrb[0].mxu0
        %v499 = vadd.f32 0.0, %v498
        %v500 = vpop.f32.mrb[0].mxu0
        %501 = vdwg.mxu0
        %v502 = vrcp.pop %v428
        %v503 = vmul.f32 1.0, %v502
        %v504 = vmul.f32 %v499, %v503
        %505 = vst.msk [vmem:[#allocation2] sm:$0xff] %vm343, %v504
        %506 = vrot.lane.b32.xlu0 %v339, 112
        %v507 = vpop.permute.xlu0 %506
        %508 = vrot.lane.b32.xlu0 %v335, 48
        %v509 = vpop.permute.xlu0 %508
        %v510 = vsel %vm343, %v507, 0
        %v512 = vsel %vm343, %v509, 0
        %514 = vmatprep.subr.mxu0 0.0
        %515 = vmatpush1.xpose.msra.mxu0 %v512
        %516 = vmatprep.subr.mxu0 0.0
        %517 = vmatpush1.xpose.msra.mxu0 0.0
        %518 = vmatprep.subr.mxu0 0.0
        %519 = vmatpush1.xpose.msra.mxu0 0.0
        %520 = vmatprep.subr.mxu0 0.0
        %521 = vmatpush1.xpose.msra.mxu0 0.0
        %522 = vmatprep.subr.mxu0 0.0
        %523 = vmatpush1.xpose.msra.mxu0 0.0
        %524 = vmatprep.subr.mxu0 0.0
        %525 = vmatpush1.xpose.msra.mxu0 0.0
        %526 = vmatprep.subr.mxu0 0.0
        %527 = vmatpush1.xpose.msra.mxu0 0.0
        %528 = vmatprep.subr.mxu0 0.0
        %529 = vmatpush1.xpose.msra.mxu0 0.0
        %530 = vmatprep.subr.mxu0 0.0
        %531 = vmatpush1.xpose.msra.mxu0 0.0
        %532 = vmatprep.subr.mxu0 0.0
        %533 = vmatpush1.xpose.msra.mxu0 0.0
        %534 = vmatprep.subr.mxu0 0.0
        %535 = vmatpush1.xpose.msra.mxu0 0.0
        %536 = vmatprep.subr.mxu0 0.0
        %537 = vmatpush1.xpose.msra.mxu0 0.0
        %538 = vmatprep.subr.mxu0 0.0
        %539 = vmatpush1.xpose.msra.mxu0 0.0
        %540 = vmatprep.subr.mxu0 0.0
        %541 = vmatpush1.xpose.msra.mxu0 0.0
        %542 = vmatprep.subr.mxu0 0.0
        %543 = vmatpush1.xpose.msra.mxu0 0.0
        %544 = vmatprep.subr.mxu0 0.0
        %545 = vmatpush1.xpose.msra.mxu0 0.0
        %546 = vmatprep.subr.mxu0 0.0
        %547 = vmatpush1.xpose.msra.mxu0 0.0
        %548 = vmatprep.subr.mxu0 0.0
        %549 = vmatpush1.xpose.msra.mxu0 0.0
        %550 = vmatprep.subr.mxu0 0.0
        %551 = vmatpush1.xpose.msra.mxu0 0.0
        %552 = vmatprep.subr.mxu0 0.0
        %553 = vmatpush1.xpose.msra.mxu0 0.0
        %554 = vmatprep.subr.mxu0 0.0
        %555 = vmatpush1.xpose.msra.mxu0 0.0
        %556 = vmatprep.subr.mxu0 0.0
        %557 = vmatpush1.xpose.msra.mxu0 0.0
        %558 = vmatprep.subr.mxu0 0.0
        %559 = vmatpush1.xpose.msra.mxu0 0.0
        %560 = vmatprep.subr.mxu0 0.0
        %561 = vmatpush1.xpose.msra.mxu0 0.0
        %562 = vmatprep.subr.mxu0 0.0
        %563 = vmatpush1.xpose.msra.mxu0 0.0
        %564 = vmatprep.subr.mxu0 0.0
        %565 = vmatpush1.xpose.msra.mxu0 0.0
        %566 = vmatprep.subr.mxu0 0.0
        %567 = vmatpush1.xpose.msra.mxu0 0.0
        %568 = vmatprep.subr.mxu0 0.0
        %569 = vmatpush1.xpose.msra.mxu0 0.0
        %570 = vmatprep.subr.mxu0 0.0
        %571 = vmatpush1.xpose.msra.mxu0 0.0
        %572 = vmatprep.subr.mxu0 0.0
        %573 = vmatpush1.xpose.msra.mxu0 0.0
        %574 = vmatprep.subr.mxu0 0.0
        %575 = vmatpush1.xpose.msra.mxu0 0.0
        %576 = vmatprep.subr.mxu0 0.0
        %577 = vmatpush1.xpose.msra.mxu0 0.0
        %578 = vmatprep.mubr.f32.mxu0 0.0
        %579 = vmatmul.mubr.f32.gmra.mrb[0].mxu0 %v510
        %v580 = vpop.f32.mrb[0].mxu0
        %v581 = vadd.f32 0.0, %v580
        %v582 = vpop.f32.mrb[0].mxu0
        %583 = vdwg.mxu0
        %v584 = vsel %vm419, %v581, -inf
        %585 = vmax.xlane.f32.xlu0 %v584
        %v586 = vpop.xlane.xlu0 %585
        %v587 = vsub.f32 %v581, %v586
        %v588 = vmul.f32 %v587, 1.442695
        %v589 = vpow.pop %v588
        %v590 = vsel %vm419, %v589, 0.0
        %591 = vadd.xlane.f32.xlu0 %v590
        %v592 = vpop.xlane.xlu0 %591
        %594 = vrot.lane.b32.xlu0 %v337, 112
        %v595 = vpop.permute.xlu0 %594
        %v598 = vsel %vm419, %v589, 0
        %600 = vmatprep.subr.mxu0 0.0
        %601 = vmatpush1.msra.mxu0 %v595
        %602 = vmatprep.subr.mxu0 0.0
        %603 = vmatpush1.msra.mxu0 0.0
        %604 = vmatprep.subr.mxu0 0.0
        %605 = vmatpush1.msra.mxu0 0.0
        %606 = vmatprep.subr.mxu0 0.0
        %607 = vmatpush1.msra.mxu0 0.0
        %608 = vmatprep.subr.mxu0 0.0
        %609 = vmatpush1.msra.mxu0 0.0
        %610 = vmatprep.subr.mxu0 0.0
        %611 = vmatpush1.msra.mxu0 0.0
        %612 = vmatprep.subr.mxu0 0.0
        %613 = vmatpush1.msra.mxu0 0.0
        %614 = vmatprep.subr.mxu0 0.0
        %615 = vmatpush1.msra.mxu0 0.0
        %616 = vmatprep.subr.mxu0 0.0
        %617 = vmatpush1.msra.mxu0 0.0
        %618 = vmatprep.subr.mxu0 0.0
        %619 = vmatpush1.msra.mxu0 0.0
        %620 = vmatprep.subr.mxu0 0.0
        %621 = vmatpush1.msra.mxu0 0.0
        %622 = vmatprep.subr.mxu0 0.0
        %623 = vmatpush1.msra.mxu0 0.0
        %624 = vmatprep.subr.mxu0 0.0
        %625 = vmatpush1.msra.mxu0 0.0
        %626 = vmatprep.subr.mxu0 0.0
        %627 = vmatpush1.msra.mxu0 0.0
        %628 = vmatprep.subr.mxu0 0.0
        %629 = vmatpush1.msra.mxu0 0.0
        %630 = vmatprep.subr.mxu0 0.0
        %631 = vmatpush1.msra.mxu0 0.0
        %632 = vmatprep.subr.mxu0 0.0
        %633 = vmatpush1.msra.mxu0 0.0
        %634 = vmatprep.subr.mxu0 0.0
        %635 = vmatpush1.msra.mxu0 0.0
        %636 = vmatprep.subr.mxu0 0.0
        %637 = vmatpush1.msra.mxu0 0.0
        %638 = vmatprep.subr.mxu0 0.0
        %639 = vmatpush1.msra.mxu0 0.0
        %640 = vmatprep.subr.mxu0 0.0
        %641 = vmatpush1.msra.mxu0 0.0
        %642 = vmatprep.subr.mxu0 0.0
        %643 = vmatpush1.msra.mxu0 0.0
        %644 = vmatprep.subr.mxu0 0.0
        %645 = vmatpush1.msra.mxu0 0.0
        %646 = vmatprep.subr.mxu0 0.0
        %647 = vmatpush1.msra.mxu0 0.0
        %648 = vmatprep.subr.mxu0 0.0
        %649 = vmatpush1.msra.mxu0 0.0
        %650 = vmatprep.subr.mxu0 0.0
        %651 = vmatpush1.msra.mxu0 0.0
        %652 = vmatprep.subr.mxu0 0.0
        %653 = vmatpush1.msra.mxu0 0.0
        %654 = vmatprep.subr.mxu0 0.0
        %655 = vmatpush1.msra.mxu0 0.0
        %656 = vmatprep.subr.mxu0 0.0
        %657 = vmatpush1.msra.mxu0 0.0
        %658 = vmatprep.subr.mxu0 0.0
        %659 = vmatpush1.msra.mxu0 0.0
        %660 = vmatprep.subr.mxu0 0.0
        %661 = vmatpush1.msra.mxu0 0.0
        %662 = vmatprep.subr.mxu0 0.0
        %663 = vmatpush1.msra.mxu0 0.0
        %664 = vmatprep.mubr.f32.mxu0 0.0
        %665 = vmatmul.mubr.f32.gmra.mrb[0].mxu0 %v598
        %v666 = vpop.f32.mrb[0].mxu0
        %v667 = vadd.f32 0.0, %v666
        %v668 = vpop.f32.mrb[0].mxu0
        %669 = vdwg.mxu0
        %v670 = vrcp.pop %v592
        %v671 = vmul.f32 1.0, %v670
        %v672 = vmul.f32 %v667, %v671
        %674 = vrot.lane.b32.xlu0 %v672, 16
        %v675 = vpop.permute.xlu0 %674
        %vm677 = vcmask 261248
        %678 = vst.msk [vmem:[#allocation2] sm:$0xff] %vm677, %v675
        %679 = vrot.lane.b32.xlu0 %v339, 96
        %v680 = vpop.permute.xlu0 %679
        %681 = vrot.lane.b32.xlu0 %v335, 32
        %v682 = vpop.permute.xlu0 %681
        %v683 = vsel %vm343, %v680, 0
        %v685 = vsel %vm343, %v682, 0
        %687 = vmatprep.subr.mxu0 0.0
        %688 = vmatpush1.xpose.msra.mxu0 %v685
        %689 = vmatprep.subr.mxu0 0.0
        %690 = vmatpush1.xpose.msra.mxu0 0.0
        %691 = vmatprep.subr.mxu0 0.0
        %692 = vmatpush1.xpose.msra.mxu0 0.0
        %693 = vmatprep.subr.mxu0 0.0
        %694 = vmatpush1.xpose.msra.mxu0 0.0
        %695 = vmatprep.subr.mxu0 0.0
        %696 = vmatpush1.xpose.msra.mxu0 0.0
        %697 = vmatprep.subr.mxu0 0.0
        %698 = vmatpush1.xpose.msra.mxu0 0.0
        %699 = vmatprep.subr.mxu0 0.0
        %700 = vmatpush1.xpose.msra.mxu0 0.0
        %701 = vmatprep.subr.mxu0 0.0
        %702 = vmatpush1.xpose.msra.mxu0 0.0
        %703 = vmatprep.subr.mxu0 0.0
        %704 = vmatpush1.xpose.msra.mxu0 0.0
        %705 = vmatprep.subr.mxu0 0.0
        %706 = vmatpush1.xpose.msra.mxu0 0.0
        %707 = vmatprep.subr.mxu0 0.0
        %708 = vmatpush1.xpose.msra.mxu0 0.0
        %709 = vmatprep.subr.mxu0 0.0
        %710 = vmatpush1.xpose.msra.mxu0 0.0
        %711 = vmatprep.subr.mxu0 0.0
        %712 = vmatpush1.xpose.msra.mxu0 0.0
        %713 = vmatprep.subr.mxu0 0.0
        %714 = vmatpush1.xpose.msra.mxu0 0.0
        %715 = vmatprep.subr.mxu0 0.0
        %716 = vmatpush1.xpose.msra.mxu0 0.0
        %717 = vmatprep.subr.mxu0 0.0
        %718 = vmatpush1.xpose.msra.mxu0 0.0
        %719 = vmatprep.subr.mxu0 0.0
        %720 = vmatpush1.xpose.msra.mxu0 0.0
        %721 = vmatprep.subr.mxu0 0.0
        %722 = vmatpush1.xpose.msra.mxu0 0.0
        %723 = vmatprep.subr.mxu0 0.0
        %724 = vmatpush1.xpose.msra.mxu0 0.0
        %725 = vmatprep.subr.mxu0 0.0
        %726 = vmatpush1.xpose.msra.mxu0 0.0
        %727 = vmatprep.subr.mxu0 0.0
        %728 = vmatpush1.xpose.msra.mxu0 0.0
        %729 = vmatprep.subr.mxu0 0.0
        %730 = vmatpush1.xpose.msra.mxu0 0.0
        %731 = vmatprep.subr.mxu0 0.0
        %732 = vmatpush1.xpose.msra.mxu0 0.0
        %733 = vmatprep.subr.mxu0 0.0
        %734 = vmatpush1.xpose.msra.mxu0 0.0
        %735 = vmatprep.subr.mxu0 0.0
        %736 = vmatpush1.xpose.msra.mxu0 0.0
        %737 = vmatprep.subr.mxu0 0.0
        %738 = vmatpush1.xpose.msra.mxu0 0.0
        %739 = vmatprep.subr.mxu0 0.0
        %740 = vmatpush1.xpose.msra.mxu0 0.0
        %741 = vmatprep.subr.mxu0 0.0
        %742 = vmatpush1.xpose.msra.mxu0 0.0
        %743 = vmatprep.subr.mxu0 0.0
        %744 = vmatpush1.xpose.msra.mxu0 0.0
        %745 = vmatprep.subr.mxu0 0.0
        %746 = vmatpush1.xpose.msra.mxu0 0.0
        %747 = vmatprep.subr.mxu0 0.0
        %748 = vmatpush1.xpose.msra.mxu0 0.0
        %749 = vmatprep.subr.mxu0 0.0
        %750 = vmatpush1.xpose.msra.mxu0 0.0
        %751 = vmatprep.mubr.f32.mxu0 0.0
        %752 = vmatmul.mubr.f32.gmra.mrb[0].mxu0 %v683
        %v753 = vpop.f32.mrb[0].mxu0
        %v754 = vadd.f32 0.0, %v753
        %v755 = vpop.f32.mrb[0].mxu0
        %756 = vdwg.mxu0
        %v757 = vsel %vm419, %v754, -inf
        %758 = vmax.xlane.f32.xlu0 %v757
        %v759 = vpop.xlane.xlu0 %758
        %v760 = vsub.f32 %v754, %v759
        %v761 = vmul.f32 %v760, 1.442695
        %v762 = vpow.pop %v761
        %v763 = vsel %vm419, %v762, 0.0
        %764 = vadd.xlane.f32.xlu0 %v763
        %v765 = vpop.xlane.xlu0 %764
        %766 = vrot.lane.b32.xlu0 %v337, 96
        %v767 = vpop.permute.xlu0 %766
        %v770 = vsel %vm419, %v762, 0
        %772 = vmatprep.subr.mxu0 0.0
        %773 = vmatpush1.msra.mxu0 %v767
        %774 = vmatprep.subr.mxu0 0.0
        %775 = vmatpush1.msra.mxu0 0.0
        %776 = vmatprep.subr.mxu0 0.0
        %777 = vmatpush1.msra.mxu0 0.0
        %778 = vmatprep.subr.mxu0 0.0
        %779 = vmatpush1.msra.mxu0 0.0
        %780 = vmatprep.subr.mxu0 0.0
        %781 = vmatpush1.msra.mxu0 0.0
        %782 = vmatprep.subr.mxu0 0.0
        %783 = vmatpush1.msra.mxu0 0.0
        %784 = vmatprep.subr.mxu0 0.0
        %785 = vmatpush1.msra.mxu0 0.0
        %786 = vmatprep.subr.mxu0 0.0
        %787 = vmatpush1.msra.mxu0 0.0
        %788 = vmatprep.subr.mxu0 0.0
        %789 = vmatpush1.msra.mxu0 0.0
        %790 = vmatprep.subr.mxu0 0.0
        %791 = vmatpush1.msra.mxu0 0.0
        %792 = vmatprep.subr.mxu0 0.0
        %793 = vmatpush1.msra.mxu0 0.0
        %794 = vmatprep.subr.mxu0 0.0
        %795 = vmatpush1.msra.mxu0 0.0
        %796 = vmatprep.subr.mxu0 0.0
        %797 = vmatpush1.msra.mxu0 0.0
        %798 = vmatprep.subr.mxu0 0.0
        %799 = vmatpush1.msra.mxu0 0.0
        %800 = vmatprep.subr.mxu0 0.0
        %801 = vmatpush1.msra.mxu0 0.0
        %802 = vmatprep.subr.mxu0 0.0
        %803 = vmatpush1.msra.mxu0 0.0
        %804 = vmatprep.subr.mxu0 0.0
        %805 = vmatpush1.msra.mxu0 0.0
        %806 = vmatprep.subr.mxu0 0.0
        %807 = vmatpush1.msra.mxu0 0.0
        %808 = vmatprep.subr.mxu0 0.0
        %809 = vmatpush1.msra.mxu0 0.0
        %810 = vmatprep.subr.mxu0 0.0
        %811 = vmatpush1.msra.mxu0 0.0
        %812 = vmatprep.subr.mxu0 0.0
        %813 = vmatpush1.msra.mxu0 0.0
        %814 = vmatprep.subr.mxu0 0.0
        %815 = vmatpush1.msra.mxu0 0.0
        %816 = vmatprep.subr.mxu0 0.0
        %817 = vmatpush1.msra.mxu0 0.0
        %818 = vmatprep.subr.mxu0 0.0
        %819 = vmatpush1.msra.mxu0 0.0
        %820 = vmatprep.subr.mxu0 0.0
        %821 = vmatpush1.msra.mxu0 0.0
        %822 = vmatprep.subr.mxu0 0.0
        %823 = vmatpush1.msra.mxu0 0.0
        %824 = vmatprep.subr.mxu0 0.0
        %825 = vmatpush1.msra.mxu0 0.0
        %826 = vmatprep.subr.mxu0 0.0
        %827 = vmatpush1.msra.mxu0 0.0
        %828 = vmatprep.subr.mxu0 0.0
        %829 = vmatpush1.msra.mxu0 0.0
        %830 = vmatprep.subr.mxu0 0.0
        %831 = vmatpush1.msra.mxu0 0.0
        %832 = vmatprep.subr.mxu0 0.0
        %833 = vmatpush1.msra.mxu0 0.0
        %834 = vmatprep.subr.mxu0 0.0
        %835 = vmatpush1.msra.mxu0 0.0
        %836 = vmatprep.mubr.f32.mxu0 0.0
        %837 = vmatmul.mubr.f32.gmra.mrb[0].mxu0 %v770
        %v838 = vpop.f32.mrb[0].mxu0
        %v839 = vadd.f32 0.0, %v838
        %v840 = vpop.f32.mrb[0].mxu0
        %841 = vdwg.mxu0
        %v842 = vrcp.pop %v765
        %v843 = vmul.f32 1.0, %v842
        %v844 = vmul.f32 %v839, %v843
        %846 = vrot.lane.b32.xlu0 %v844, 32
        %v847 = vpop.permute.xlu0 %846
        %vm849 = vcmask 392448
        %850 = vst.msk [vmem:[#allocation2] sm:$0xff] %vm849, %v847
        %851 = vrot.lane.b32.xlu0 %v339, 80
        %v852 = vpop.permute.xlu0 %851
        %853 = vrot.lane.b32.xlu0 %v335, 16
        %v854 = vpop.permute.xlu0 %853
        %v855 = vsel %vm343, %v852, 0
        %v857 = vsel %vm343, %v854, 0
        %859 = vmatprep.subr.mxu0 0.0
        %860 = vmatpush1.xpose.msra.mxu0 %v857
        %861 = vmatprep.subr.mxu0 0.0
        %862 = vmatpush1.xpose.msra.mxu0 0.0
        %863 = vmatprep.subr.mxu0 0.0
        %864 = vmatpush1.xpose.msra.mxu0 0.0
        %865 = vmatprep.subr.mxu0 0.0
        %866 = vmatpush1.xpose.msra.mxu0 0.0
        %867 = vmatprep.subr.mxu0 0.0
        %868 = vmatpush1.xpose.msra.mxu0 0.0
        %869 = vmatprep.subr.mxu0 0.0
        %870 = vmatpush1.xpose.msra.mxu0 0.0
        %871 = vmatprep.subr.mxu0 0.0
        %872 = vmatpush1.xpose.msra.mxu0 0.0
        %873 = vmatprep.subr.mxu0 0.0
        %874 = vmatpush1.xpose.msra.mxu0 0.0
        %875 = vmatprep.subr.mxu0 0.0
        %876 = vmatpush1.xpose.msra.mxu0 0.0
        %877 = vmatprep.subr.mxu0 0.0
        %878 = vmatpush1.xpose.msra.mxu0 0.0
        %879 = vmatprep.subr.mxu0 0.0
        %880 = vmatpush1.xpose.msra.mxu0 0.0
        %881 = vmatprep.subr.mxu0 0.0
        %882 = vmatpush1.xpose.msra.mxu0 0.0
        %883 = vmatprep.subr.mxu0 0.0
        %884 = vmatpush1.xpose.msra.mxu0 0.0
        %885 = vmatprep.subr.mxu0 0.0
        %886 = vmatpush1.xpose.msra.mxu0 0.0
        %887 = vmatprep.subr.mxu0 0.0
        %888 = vmatpush1.xpose.msra.mxu0 0.0
        %889 = vmatprep.subr.mxu0 0.0
        %890 = vmatpush1.xpose.msra.mxu0 0.0
        %891 = vmatprep.subr.mxu0 0.0
        %892 = vmatpush1.xpose.msra.mxu0 0.0
        %893 = vmatprep.subr.mxu0 0.0
        %894 = vmatpush1.xpose.msra.mxu0 0.0
        %895 = vmatprep.subr.mxu0 0.0
        %896 = vmatpush1.xpose.msra.mxu0 0.0
        %897 = vmatprep.subr.mxu0 0.0
        %898 = vmatpush1.xpose.msra.mxu0 0.0
        %899 = vmatprep.subr.mxu0 0.0
        %900 = vmatpush1.xpose.msra.mxu0 0.0
        %901 = vmatprep.subr.mxu0 0.0
        %902 = vmatpush1.xpose.msra.mxu0 0.0
        %903 = vmatprep.subr.mxu0 0.0
        %904 = vmatpush1.xpose.msra.mxu0 0.0
        %905 = vmatprep.subr.mxu0 0.0
        %906 = vmatpush1.xpose.msra.mxu0 0.0
        %907 = vmatprep.subr.mxu0 0.0
        %908 = vmatpush1.xpose.msra.mxu0 0.0
        %909 = vmatprep.subr.mxu0 0.0
        %910 = vmatpush1.xpose.msra.mxu0 0.0
        %911 = vmatprep.subr.mxu0 0.0
        %912 = vmatpush1.xpose.msra.mxu0 0.0
        %913 = vmatprep.subr.mxu0 0.0
        %914 = vmatpush1.xpose.msra.mxu0 0.0
        %915 = vmatprep.subr.mxu0 0.0
        %916 = vmatpush1.xpose.msra.mxu0 0.0
        %917 = vmatprep.subr.mxu0 0.0
        %918 = vmatpush1.xpose.msra.mxu0 0.0
        %919 = vmatprep.subr.mxu0 0.0
        %920 = vmatpush1.xpose.msra.mxu0 0.0
        %921 = vmatprep.subr.mxu0 0.0
        %922 = vmatpush1.xpose.msra.mxu0 0.0
        %923 = vmatprep.mubr.f32.mxu0 0.0
        %924 = vmatmul.mubr.f32.gmra.mrb[0].mxu0 %v855
        %v925 = vpop.f32.mrb[0].mxu0
        %v926 = vadd.f32 0.0, %v925
        %v927 = vpop.f32.mrb[0].mxu0
        %928 = vdwg.mxu0
        %v929 = vsel %vm419, %v926, -inf
        %930 = vmax.xlane.f32.xlu0 %v929
        %v931 = vpop.xlane.xlu0 %930
        %v932 = vsub.f32 %v926, %v931
        %v933 = vmul.f32 %v932, 1.442695
        %v934 = vpow.pop %v933
        %v935 = vsel %vm419, %v934, 0.0
        %936 = vadd.xlane.f32.xlu0 %v935
        %v937 = vpop.xlane.xlu0 %936
        %938 = vrot.lane.b32.xlu0 %v337, 80
        %v939 = vpop.permute.xlu0 %938
        %v942 = vsel %vm419, %v934, 0
        %944 = vmatprep.subr.mxu0 0.0
        %945 = vmatpush1.msra.mxu0 %v939
        %946 = vmatprep.subr.mxu0 0.0
        %947 = vmatpush1.msra.mxu0 0.0
        %948 = vmatprep.subr.mxu0 0.0
        %949 = vmatpush1.msra.mxu0 0.0
        %950 = vmatprep.subr.mxu0 0.0
        %951 = vmatpush1.msra.mxu0 0.0
        %952 = vmatprep.subr.mxu0 0.0
        %953 = vmatpush1.msra.mxu0 0.0
        %954 = vmatprep.subr.mxu0 0.0
        %955 = vmatpush1.msra.mxu0 0.0
        %956 = vmatprep.subr.mxu0 0.0
        %957 = vmatpush1.msra.mxu0 0.0
        %958 = vmatprep.subr.mxu0 0.0
        %959 = vmatpush1.msra.mxu0 0.0
        %960 = vmatprep.subr.mxu0 0.0
        %961 = vmatpush1.msra.mxu0 0.0
        %962 = vmatprep.subr.mxu0 0.0
        %963 = vmatpush1.msra.mxu0 0.0
        %964 = vmatprep.subr.mxu0 0.0
        %965 = vmatpush1.msra.mxu0 0.0
        %966 = vmatprep.subr.mxu0 0.0
        %967 = vmatpush1.msra.mxu0 0.0
        %968 = vmatprep.subr.mxu0 0.0
        %969 = vmatpush1.msra.mxu0 0.0
        %970 = vmatprep.subr.mxu0 0.0
        %971 = vmatpush1.msra.mxu0 0.0
        %972 = vmatprep.subr.mxu0 0.0
        %973 = vmatpush1.msra.mxu0 0.0
        %974 = vmatprep.subr.mxu0 0.0
        %975 = vmatpush1.msra.mxu0 0.0
        %976 = vmatprep.subr.mxu0 0.0
        %977 = vmatpush1.msra.mxu0 0.0
        %978 = vmatprep.subr.mxu0 0.0
        %979 = vmatpush1.msra.mxu0 0.0
        %980 = vmatprep.subr.mxu0 0.0
        %981 = vmatpush1.msra.mxu0 0.0
        %982 = vmatprep.subr.mxu0 0.0
        %983 = vmatpush1.msra.mxu0 0.0
        %984 = vmatprep.subr.mxu0 0.0
        %985 = vmatpush1.msra.mxu0 0.0
        %986 = vmatprep.subr.mxu0 0.0
        %987 = vmatpush1.msra.mxu0 0.0
        %988 = vmatprep.subr.mxu0 0.0
        %989 = vmatpush1.msra.mxu0 0.0
        %990 = vmatprep.subr.mxu0 0.0
        %991 = vmatpush1.msra.mxu0 0.0
        %992 = vmatprep.subr.mxu0 0.0
        %993 = vmatpush1.msra.mxu0 0.0
        %994 = vmatprep.subr.mxu0 0.0
        %995 = vmatpush1.msra.mxu0 0.0
        %996 = vmatprep.subr.mxu0 0.0
        %997 = vmatpush1.msra.mxu0 0.0
        %998 = vmatprep.subr.mxu0 0.0
        %999 = vmatpush1.msra.mxu0 0.0
        %1000 = vmatprep.subr.mxu0 0.0
        %1001 = vmatpush1.msra.mxu0 0.0
        %1002 = vmatprep.subr.mxu0 0.0
        %1003 = vmatpush1.msra.mxu0 0.0
        %1004 = vmatprep.subr.mxu0 0.0
        %1005 = vmatpush1.msra.mxu0 0.0
        %1006 = vmatprep.subr.mxu0 0.0
        %1007 = vmatpush1.msra.mxu0 0.0
        %1008 = vmatprep.mubr.f32.mxu0 0.0
        %1009 = vmatmul.mubr.f32.gmra.mrb[0].mxu0 %v942
        %v1010 = vpop.f32.mrb[0].mxu0
        %v1011 = vadd.f32 0.0, %v1010
        %v1012 = vpop.f32.mrb[0].mxu0
        %1013 = vdwg.mxu0
        %v1014 = vrcp.pop %v937
        %v1015 = vmul.f32 1.0, %v1014
        %v1016 = vmul.f32 %v1011, %v1015
        %1018 = vrot.lane.b32.xlu0 %v1016, 48
        %v1019 = vpop.permute.xlu0 %1018
        %vm1021 = vcmask 523648
        %1022 = vst.msk [vmem:[#allocation2] sm:$0xff] %vm1021, %v1019
        %v1023 = vld [vmem:[#allocation2] sm:$0xff]
        %v1024 = vld [vmem:[#allocation8] sm:$0xff]
        %v1025 = vld [vmem:[#allocation8 + $0x8] sm:$0xff]
        %v1026 = vld [vmem:[#allocation8 + $0x10] sm:$0xff]
        %v1027 = vld [vmem:[#allocation8 + $0x18] sm:$0xff]
        %v1028 = vld [vmem:[#allocation8 + $0x20] sm:$0xff]
        %v1029 = vld [vmem:[#allocation8 + $0x28] sm:$0xff]
        %v1030 = vld [vmem:[#allocation8 + $0x30] sm:$0xff]
        %v1031 = vld [vmem:[#allocation8 + $0x38] sm:$0xff]
        %v1032 = vld [vmem:[#allocation9] sm:$0x1]
        %v1034 = vlaneseq
        %v1035 = vshrl.u32 %v1034, 7
        %v1036 = vsub.s32 0, %v1035
        %v1037 = vrot.slane %v1032, %v1036
        %vm1039 = vcmask 523264
        %v1041 = vsel %vm1039, %v1023, 0
        %1043 = vmatprep.subr.mxu0 0.0
        %1044 = vmatpush1.msra.mxu0 %v1024
        %1045 = vmatprep.subr.mxu0 0.0
        %1046 = vmatpush1.msra.mxu0 %v1025
        %1047 = vmatprep.subr.mxu0 0.0
        %1048 = vmatpush1.msra.mxu0 %v1026
        %1049 = vmatprep.subr.mxu0 0.0
        %1050 = vmatpush1.msra.mxu0 %v1027
        %1051 = vmatprep.subr.mxu0 0.0
        %1052 = vmatpush1.msra.mxu0 %v1028
        %1053 = vmatprep.subr.mxu0 0.0
        %1054 = vmatpush1.msra.mxu0 %v1029
        %1055 = vmatprep.subr.mxu0 0.0
        %1056 = vmatpush1.msra.mxu0 %v1030
        %1057 = vmatprep.subr.mxu0 0.0
        %1058 = vmatpush1.msra.mxu0 %v1031
        %1059 = vmatprep.subr.mxu0 0.0
        %1060 = vmatpush1.msra.mxu0 0.0
        %1061 = vmatprep.subr.mxu0 0.0
        %1062 = vmatpush1.msra.mxu0 0.0
        %1063 = vmatprep.subr.mxu0 0.0
        %1064 = vmatpush1.msra.mxu0 0.0
        %1065 = vmatprep.subr.mxu0 0.0
        %1066 = vmatpush1.msra.mxu0 0.0
        %1067 = vmatprep.subr.mxu0 0.0
        %1068 = vmatpush1.msra.mxu0 0.0
        %1069 = vmatprep.subr.mxu0 0.0
        %1070 = vmatpush1.msra.mxu0 0.0
        %1071 = vmatprep.subr.mxu0 0.0
        %1072 = vmatpush1.msra.mxu0 0.0
        %1073 = vmatprep.subr.mxu0 0.0
        %1074 = vmatpush1.msra.mxu0 0.0
        %1075 = vmatprep.subr.mxu0 0.0
        %1076 = vmatpush1.msra.mxu0 0.0
        %1077 = vmatprep.subr.mxu0 0.0
        %1078 = vmatpush1.msra.mxu0 0.0
        %1079 = vmatprep.subr.mxu0 0.0
        %1080 = vmatpush1.msra.mxu0 0.0
        %1081 = vmatprep.subr.mxu0 0.0
        %1082 = vmatpush1.msra.mxu0 0.0
        %1083 = vmatprep.subr.mxu0 0.0
        %1084 = vmatpush1.msra.mxu0 0.0
        %1085 = vmatprep.subr.mxu0 0.0
        %1086 = vmatpush1.msra.mxu0 0.0
        %1087 = vmatprep.subr.mxu0 0.0
        %1088 = vmatpush1.msra.mxu0 0.0
        %1089 = vmatprep.subr.mxu0 0.0
        %1090 = vmatpush1.msra.mxu0 0.0
        %1091 = vmatprep.subr.mxu0 0.0
        %1092 = vmatpush1.msra.mxu0 0.0
        %1093 = vmatprep.subr.mxu0 0.0
        %1094 = vmatpush1.msra.mxu0 0.0
        %1095 = vmatprep.subr.mxu0 0.0
        %1096 = vmatpush1.msra.mxu0 0.0
        %1097 = vmatprep.subr.mxu0 0.0
        %1098 = vmatpush1.msra.mxu0 0.0
        %1099 = vmatprep.subr.mxu0 0.0
        %1100 = vmatpush1.msra.mxu0 0.0
        %1101 = vmatprep.subr.mxu0 0.0
        %1102 = vmatpush1.msra.mxu0 0.0
        %1103 = vmatprep.subr.mxu0 0.0
        %1104 = vmatpush1.msra.mxu0 0.0
        %1105 = vmatprep.subr.mxu0 0.0
        %1106 = vmatpush1.msra.mxu0 0.0
        %1107 = vmatprep.mubr.f32.mxu0 0.0
        %1108 = vmatmul.mubr.f32.gmra.mrb[0].mxu0 %v1041
        %v1109 = vpop.f32.mrb[0].mxu0
        %v1110 = vadd.f32 %v1037, %v1109
        %v1111 = vpop.f32.mrb[0].mxu0
        %1112 = vdwg.mxu0
        %1113 = vst.msk [vmem:[%s254] sm:$0xff] %vm264, %v1110
        %s1114 = sand.u32 %s120, 1
        %s1115 = scalar_lea.sflag [#allocation5], %s1114
        %s1116 = sand.u32 %s120, 1
        %s1117 = smul.addr %s1116, 8
        %s1118 = scalar_lea.vmem [#allocation11], %s1117
        // Predicated region
        $region53: #{tpu_custom_call.1} parent=35 // pred_check
          %p1119 = pneg %p130
        $region54: #{tpu_custom_call.1} parent=35 // pred_check_branch
          %1121 = sbr.rel (%p1119) target = $region56
        $region55: #{tpu_custom_call.1} parent=35 // pred_region
          %s1123 = ssub.s32 128, 128
          %1124 = vsyncadd %s1115, %s1123
          %s1125 = smul.addr %s23, 128
          %s1126 = scalar_lea.hbm %s4, %s1125
          %s1128 = sshll.u32 %s1118, 4
          %s1129 = int_to_ptr.vmem [resolvable:$true] %s1128
          %1131 = dma.vmem_to_hbm [thread:$0]  %s1129, 128, %s1126, %s1115
        $region56: #{tpu_custom_call.1} parent=35 // pred_fallthru
          _
      $region36: #{tpu_custom_call.1} parent=5 // pred_fallthru
        _
      %p1132 = scmp.le.s32.totalorder 2, %s18
      // Predicated region
      $region57: #{tpu_custom_call.1} parent=5 // pred_check
        %p1133 = pneg %p1132
      $region58: #{tpu_custom_call.1} parent=5 // pred_check_branch
        %1135 = sbr.rel (%p1133) target = $region60
      $region59: #{tpu_custom_call.1} parent=5 // pred_region
        %s1136 = ssub.s32 %s18, 2
        // Predicated region
        $region61: #{tpu_custom_call.1} parent=59 // pred_check
          %p1137 = pneg %p136
        $region62: #{tpu_custom_call.1} parent=59 // pred_check_branch
          %1139 = sbr.rel (%p1137) target = $region64
        $region63: #{tpu_custom_call.1} parent=59 // pred_region
          %s1140 = sand.u32 %s121, 1
          %s1141 = scalar_lea.sflag [#allocation5], %s1140
          %s1142 = sand.u32 %s121, 1
          %s1143 = smul.addr %s1142, 8
          %s1144 = scalar_lea.vmem [#allocation11], %s1143
          %1145 = dma.done %s1141, 128
        $region64: #{tpu_custom_call.1} parent=59 // pred_fallthru
          _
      $region60: #{tpu_custom_call.1} parent=5 // pred_fallthru
        _
    $region6: #{tpu_custom_call.1} parent=1 // loop_footer
      %s22 = sadd.s32 1, %s18
    $region7: #{tpu_custom_call.1} parent=1 // loop_footer_branch
      %17 = sbr.rel target = $region3
    $region8: #{tpu_custom_call.1} parent=1 // loop_exit
      _
    %1146 = vsyncpa [#allocation4], 1
    %s1147 = scalar_lea.sflag [#allocation4], 1
    %1148 = vsyncpa %s1147, 1
    %1149 = vsyncpa [#allocation7], 1
    %1150 = vsyncpa [#allocation10], 1
    %1151 = vsyncpa [#allocation5], 1
    %s1152 = scalar_lea.sflag [#allocation5], 1
    %1153 = vsyncpa %s1152, 1

</llo_original>
